<compile_context>
chip_gen: v6e
topology: v6e:2x2x1
jax: 0.10.0
libtpu: 0.0.40
codegen_flags: <defaults>
</compile_context>

<pallas_src>
import functools
import math
from typing import NamedTuple

import jax
import jax.numpy as jnp
from jax.experimental import pallas as pl
from jax.experimental.pallas import tpu as pltpu

_LN_EPS = 1e-5  # nn.LayerNorm default eps
_LANE = 128
_SUB = 8


def _round_up(x, m):
    return (x + m - 1) // m * m


class PaddedActorParams(NamedTuple):
    """Lane-padded, kernel-ready parameters (built once, reused every call)."""
    w1: jax.Array   # [state_dim, H1_pad]
    w2: jax.Array   # [H1_pad,   H2_pad]
    w3: jax.Array   # [H2_pad,   A_pad]
    vec: jax.Array  # [8, P] rows: b1, g1, be1, b2, g2, be2, b3, 0


# ----------------------------------------------------------------------------
# Kernel
# ----------------------------------------------------------------------------
def _layernorm(h, gamma, beta, n_real):
    """Centered LayerNorm over the last (padded) axis; statistics taken only
    over the first `n_real` columns (padded columns of h are exactly zero, so
    the sum needs no mask; the variance term masks (h - mu) on pad columns)."""
    width = h.shape[-1]
    inv_n = 1.0 / float(n_real)
    mu = jnp.sum(h, axis=-1, keepdims=True) * inv_n
    d = h - mu
    if width != n_real:  # static check; mask pad cols so var is exact
        lane = jax.lax.broadcasted_iota(jnp.int32, (1, width), 1)
        d = jnp.where(lane < n_real, d, 0.0)
    var = jnp.sum(d * d, axis=-1, keepdims=True) * inv_n
    return d * jax.lax.rsqrt(var + _LN_EPS) * gamma + beta


def _leaky_relu(h, slope):
    return jnp.where(h >= 0, h, slope * h)


def actor_kernel(x_ref, w1_ref, w2_ref, w3_ref, vec_ref, out_ref, *,
                 max_action, leaky_slope,
                 h1, h2, a_dim, h1_pad, h2_pad, a_pad):
    x = x_ref[...]        # (TILE_B, state_dim) f32 (unpadded lane dim)
    vec = vec_ref[...]    # (8, P) f32 packed per-layer vectors

    b1, g1, be1 = vec[0:1, :h1_pad], vec[1:2, :h1_pad], vec[2:3, :h1_pad]
    b2, g2, be2 = vec[3:4, :h2_pad], vec[4:5, :h2_pad], vec[5:6, :h2_pad]
    b3 = vec[6:7, :a_pad]

    # fc1 -> ln1 -> leaky_relu
    h = jnp.dot(x, w1_ref[...], preferred_element_type=jnp.float32) + b1
    h = _leaky_relu(_layernorm(h, g1, be1, h1), leaky_slope)

    # fc2 -> ln2 -> leaky_relu
    h = jnp.dot(h, w2_ref[...], preferred_element_type=jnp.float32) + b2
    h = _leaky_relu(_layernorm(h, g2, be2, h2), leaky_slope)

    # fc3 -> tanh -> scale; store only the real action lanes (masked vst)
    y = jnp.dot(h, w3_ref[...], preferred_element_type=jnp.float32) + b3
    out_ref[...] = jnp.tanh(y[:, :a_dim]) * max_action


# ----------------------------------------------------------------------------
# Wrapper
# ----------------------------------------------------------------------------
def pad_actor_params(params):
    """One-time padding of real parameters into a kernel-ready layout."""
    S, H1 = params["w1"].shape
    H2 = params["w2"].shape[1]
    A = params["w3"].shape[1]
    H1_pad, H2_pad, A_pad = (_round_up(d, _LANE) for d in (H1, H2, A))
    P = max(H1_pad, H2_pad, A_pad)

    def pad2(w, shape):
        pads = [(0, t - s) for s, t in zip(w.shape, shape)]
        return jnp.pad(w, pads) if any(p[1] for p in pads) else w

    vec = jnp.zeros((8, P), jnp.float32)
    vec = vec.at[0, :H1].set(params["b1"])
    vec = vec.at[1, :H1].set(params["g1"])
    vec = vec.at[2, :H1].set(params["be1"])
    vec = vec.at[3, :H2].set(params["b2"])
    vec = vec.at[4, :H2].set(params["g2"])
    vec = vec.at[5, :H2].set(params["be2"])
    vec = vec.at[6, :A].set(params["b3"])

    return PaddedActorParams(
        w1=pad2(params["w1"], (S, H1_pad)),
        w2=pad2(params["w2"], (H1_pad, H2_pad)),
        w3=pad2(params["w3"], (H2_pad, A_pad)),
        vec=vec,
    )


def _actor_forward_impl(state, padded, *, state_dim, h1, h2, a_dim,
                        max_action, leaky_slope, tile_b):
    B, S = state.shape
    H1_pad = padded.w1.shape[1]
    H2_pad = padded.w2.shape[1]
    A_pad = padded.w3.shape[1]
    P = padded.vec.shape[1]

    # Batch tiling: round B to a multiple of 8, split into near-even tiles.
    B8 = _round_up(max(B, 1), _SUB)
    n_tiles = pl.cdiv(B8, tile_b)
    if n_tiles == 1 and B8 > 64:
        n_tiles = 2  # make sure both v7x TensorCores get work
    TILE_B = _round_up(pl.cdiv(B8, n_tiles), _SUB)
    B_pad = n_tiles * TILE_B

    x = state
    if B_pad != B:
        x = jnp.pad(x, ((0, B_pad - B), (0, 0)))  # batch rows only, lanes untouched

    kernel = functools.partial(
        actor_kernel,
        max_action=float(max_action), leaky_slope=float(leaky_slope),
        h1=h1, h2=h2, a_dim=a_dim,
        h1_pad=H1_pad, h2_pad=H2_pad, a_pad=A_pad)

    const = lambda i: (0, 0)
    in_specs = [
        pl.BlockSpec((TILE_B, state_dim), lambda i: (i, 0)),  # full last dim: legal
        pl.BlockSpec((state_dim, H1_pad), const),             # VMEM-resident weights
        pl.BlockSpec((H1_pad, H2_pad), const),
        pl.BlockSpec((H2_pad, A_pad), const),
        pl.BlockSpec((8, P), const),                          # packed b/gamma/beta
    ]
    out_specs = pl.BlockSpec((TILE_B, a_dim), lambda i: (i, 0))

    # Advisory cost estimate in REAL (unpadded) dims.
    flops = 2 * B * (state_dim * h1 + h1 * h2 + h2 * a_dim)
    transcendentals = B * (a_dim + 2)  # tanh row + 2 rsqrt per row
    bytes_accessed = 4 * (B * state_dim + state_dim * h1 + h1 * h2
                          + h2 * a_dim + 3 * h1 + 3 * h2 + a_dim + B * a_dim)

    out = pl.pallas_call(
        kernel,
        out_shape=jax.ShapeDtypeStruct((B_pad, a_dim), jnp.float32),
        grid_spec=pltpu.PrefetchScalarGridSpec(
            num_scalar_prefetch=0,
            grid=(n_tiles,),
            in_specs=in_specs,
            out_specs=out_specs,
        ),
        compiler_params=pltpu.CompilerParams(
            dimension_semantics=("parallel",)),
        cost_estimate=pl.CostEstimate(flops=flops,
                                      transcendentals=transcendentals,
                                      bytes_accessed=bytes_accessed),
    )(x, padded.w1, padded.w2, padded.w3, padded.vec)

    return out[:B] if B_pad != B else out


def make_actor_forward(params, *, max_action, leaky_slope=0.01, tile_b=256):
    """Pads parameters once and returns a jitted forward: state [B, S] -> [B, A].
    tile_b: 128-256 is a good cross-generation default (v5e store-slot bound);
    raise to 512-1024 for very large batches on v6e/v7x."""
    S, H1 = params["w1"].shape
    H2 = params["w2"].shape[1]
    A = params["w3"].shape[1]
    padded = pad_actor_params(params)

    impl = functools.partial(
        _actor_forward_impl,
        state_dim=S, h1=H1, h2=H2, a_dim=A,
        max_action=float(max_action), leaky_slope=float(leaky_slope),
        tile_b=int(tile_b))
    fwd = jax.jit(impl)  # padded params are traced args -> weight updates OK

    def forward(state, padded_params=padded):
        return fwd(state, padded_params)

    return forward


# ----------------------------------------------------------------------------
# Init + pure-JAX reference
# ----------------------------------------------------------------------------
def init_actor_params(key, state_dim, action_dim, hidden_dim_1, hidden_dim_2,
                      leaky_slope=0.01):
    """kaiming_uniform(a=leaky_slope) weights, zero biases, LN gamma=1/beta=0,
    matching Actor.init_weights.  Weights stored as [in, out]."""
    def kaiming_uniform(k, fan_in, fan_out):
        gain = math.sqrt(2.0 / (1.0 + leaky_slope ** 2))
        bound = gain * math.sqrt(3.0 / fan_in)
        return jax.random.uniform(k, (fan_in, fan_out), jnp.float32,
                                  minval=-bound, maxval=bound)

    k1, k2, k3 = jax.random.split(key, 3)
    return {
        "w1": kaiming_uniform(k1, state_dim, hidden_dim_1),
        "b1": jnp.zeros((hidden_dim_1,), jnp.float32),
        "g1": jnp.ones((hidden_dim_1,), jnp.float32),
        "be1": jnp.zeros((hidden_dim_1,), jnp.float32),
        "w2": kaiming_uniform(k2, hidden_dim_1, hidden_dim_2),
        "b2": jnp.zeros((hidden_dim_2,), jnp.float32),
        "g2": jnp.ones((hidden_dim_2,), jnp.float32),
        "be2": jnp.zeros((hidden_dim_2,), jnp.float32),
        "w3": kaiming_uniform(k3, hidden_dim_2, action_dim),
        "b3": jnp.zeros((action_dim,), jnp.float32),
    }


def actor_forward_ref(state, params, *, max_action, leaky_slope=0.01):
    """Pure-JAX reference for correctness checking."""
    def ln(h, g, b):
        mu = jnp.mean(h, -1, keepdims=True)
        var = jnp.mean((h - mu) ** 2, -1, keepdims=True)
        return (h - mu) / jnp.sqrt(var + _LN_EPS) * g + b

    def lrelu(h):
        return jnp.where(h >= 0, h, leaky_slope * h)

    h = lrelu(ln(state @ params["w1"] + params["b1"], params["g1"], params["be1"]))
    h = lrelu(ln(h @ params["w2"] + params["b2"], params["g2"], params["be2"]))
    return jnp.tanh(h @ params["w3"] + params["b3"]) * max_action


if __name__ == "__main__":
    # Small shapes consistent with the hockey-env TD3 actor.
    batch, state_dim, action_dim = 2, 16, 4
    hidden_dim_1, hidden_dim_2 = 32, 32
    max_action, leaky_slope = 1.0, 0.01

    key = jax.random.PRNGKey(0)
    k_params, k_state = jax.random.split(key)
    params = init_actor_params(k_params, state_dim, action_dim,
                               hidden_dim_1, hidden_dim_2, leaky_slope)
    state = jax.random.normal(k_state, (batch, state_dim), jnp.float32)

    actor = make_actor_forward(params, max_action=max_action,
                               leaky_slope=leaky_slope)

    out = jax.block_until_ready(actor(state))
    ref = actor_forward_ref(state, params, max_action=max_action,
                            leaky_slope=leaky_slope)
    assert out.shape == (batch, action_dim)
    assert jnp.allclose(out, ref, atol=1e-5, rtol=1e-5)

    # Larger batch: exercises the multi-tile grid (304 = 2 x 152 rows) and the
    # VMEM-resident weights across grid steps.
    big_state = jax.random.normal(jax.random.PRNGKey(2), (300, state_dim),
                                  jnp.float32)
    big_out = jax.block_until_ready(actor(big_state))
    big_ref = actor_forward_ref(big_state, params, max_action=max_action,
                                leaky_slope=leaky_slope)
    assert big_out.shape == (300, action_dim)
    assert jnp.allclose(big_out, big_ref, atol=1e-5, rtol=1e-5)

    print("KERNEL_OK")
</pallas_src>

<mosaic_0001>
module attributes {stable_mosaic.version = 11 : i64} {
  func.func @actor_kernel(%arg0: i32, %arg1: memref<8x16xf32, #tpu.memory_space<vmem>>, %arg2: memref<16x128xf32, #tpu.memory_space<vmem>>, %arg3: memref<128x128xf32, #tpu.memory_space<vmem>>, %arg4: memref<128x128xf32, #tpu.memory_space<vmem>>, %arg5: memref<8x128xf32, #tpu.memory_space<vmem>>, %arg6: memref<8x4xf32, #tpu.memory_space<vmem>>) attributes {dimension_semantics = [#tpu.dimension_semantics<parallel>], iteration_bounds = array<i64: 1>, scalar_prefetch = 0 : i64, scratch_operands = 0 : i64, tpu.core_type = #tpu.core_type<tc>, window_params = [{transform_indices = @transform_0, window_bounds = array<i64: 8, 16>}, {pipeline_mode = #tpu.pipeline_mode<synchronous>, transform_indices = @transform_1, window_bounds = array<i64: 16, 128>}, {pipeline_mode = #tpu.pipeline_mode<synchronous>, transform_indices = @transform_2, window_bounds = array<i64: 128, 128>}, {pipeline_mode = #tpu.pipeline_mode<synchronous>, transform_indices = @transform_3, window_bounds = array<i64: 128, 128>}, {pipeline_mode = #tpu.pipeline_mode<synchronous>, transform_indices = @transform_4, window_bounds = array<i64: 8, 128>}, {transform_indices = @transform_5, window_bounds = array<i64: 8, 4>}]} {
    %c0 = arith.constant 0 : index
    %c0_0 = arith.constant 0 : index
    %0 = vector.load %arg1[%c0, %c0_0] : memref<8x16xf32, #tpu.memory_space<vmem>>, vector<8x16xf32>
    %c0_1 = arith.constant 0 : index
    %c0_2 = arith.constant 0 : index
    %1 = vector.load %arg5[%c0_1, %c0_2] : memref<8x128xf32, #tpu.memory_space<vmem>>, vector<8x128xf32>
    %2 = vector.extract_strided_slice %1 {offsets = [0, 0], sizes = [1, 128], strides = [1, 1]} : vector<8x128xf32> to vector<1x128xf32>
    %3 = vector.extract_strided_slice %1 {offsets = [1, 0], sizes = [1, 128], strides = [1, 1]} : vector<8x128xf32> to vector<1x128xf32>
    %4 = vector.extract_strided_slice %1 {offsets = [2, 0], sizes = [1, 128], strides = [1, 1]} : vector<8x128xf32> to vector<1x128xf32>
    %5 = vector.extract_strided_slice %1 {offsets = [3, 0], sizes = [1, 128], strides = [1, 1]} : vector<8x128xf32> to vector<1x128xf32>
    %6 = vector.extract_strided_slice %1 {offsets = [4, 0], sizes = [1, 128], strides = [1, 1]} : vector<8x128xf32> to vector<1x128xf32>
    %7 = vector.extract_strided_slice %1 {offsets = [5, 0], sizes = [1, 128], strides = [1, 1]} : vector<8x128xf32> to vector<1x128xf32>
    %8 = vector.extract_strided_slice %1 {offsets = [6, 0], sizes = [1, 128], strides = [1, 1]} : vector<8x128xf32> to vector<1x128xf32>
    %c0_3 = arith.constant 0 : index
    %c0_4 = arith.constant 0 : index
    %9 = vector.load %arg2[%c0_3, %c0_4] : memref<16x128xf32, #tpu.memory_space<vmem>>, vector<16x128xf32>
    %cst = arith.constant dense<0.000000e+00> : vector<8x128xf32>
    %10 = tpu.matmul %0, %9, %cst {dimension_numbers = #tpu.dot_dimension_numbers<[1], [0], [0], [1], [0, 0, 1, 1], [], []>} : vector<8x16xf32>, vector<16x128xf32>, vector<8x128xf32> -> vector<8x128xf32>
    %11 = vector.broadcast %2 : vector<1x128xf32> to vector<8x128xf32>
    %12 = arith.addf %10, %11 : vector<8x128xf32>
    %cst_5 = arith.constant dense<0.000000e+00> : vector<8xf32>
    %13 = vector.multi_reduction <add>, %12, %cst_5 [1] : vector<8x128xf32> to vector<8xf32>
    %14 = vector.shape_cast %13 : vector<8xf32> to vector<8x1xf32>
    %cst_6 = arith.constant 3.125000e-02 : f32
    %15 = vector.broadcast %cst_6 : f32 to vector<8x1xf32>
    %16 = arith.mulf %14, %15 : vector<8x1xf32>
    %17 = vector.broadcast %16 : vector<8x1xf32> to vector<8x128xf32>
    %18 = arith.subf %12, %17 : vector<8x128xf32>
    %19 = tpu.iota {dimensions = array<i32: 1>} : vector<1x128xi32>
    %c32_i32 = arith.constant 32 : i32
    %20 = vector.broadcast %c32_i32 : i32 to vector<1x128xi32>
    %21 = arith.cmpi slt, %19, %20 : vector<1x128xi32>
    %cst_7 = arith.constant 0.000000e+00 : f32
    %22 = vector.shape_cast %21 : vector<1x128xi1> to vector<1x128xi1>
    %23 = vector.broadcast %22 : vector<1x128xi1> to vector<8x128xi1>
    %24 = vector.broadcast %cst_7 : f32 to vector<8x128xf32>
    %25 = arith.select %23, %18, %24 : vector<8x128xi1>, vector<8x128xf32>
    %26 = arith.mulf %25, %25 : vector<8x128xf32>
    %cst_8 = arith.constant dense<0.000000e+00> : vector<8xf32>
    %27 = vector.multi_reduction <add>, %26, %cst_8 [1] : vector<8x128xf32> to vector<8xf32>
    %28 = vector.shape_cast %27 : vector<8xf32> to vector<8x1xf32>
    %cst_9 = arith.constant 3.125000e-02 : f32
    %29 = vector.broadcast %cst_9 : f32 to vector<8x1xf32>
    %30 = arith.mulf %28, %29 : vector<8x1xf32>
    %cst_10 = arith.constant 9.99999974E-6 : f32
    %31 = vector.broadcast %cst_10 : f32 to vector<8x1xf32>
    %32 = arith.addf %30, %31 : vector<8x1xf32>
    %33 = math.rsqrt %32 : vector<8x1xf32>
    %34 = vector.broadcast %33 : vector<8x1xf32> to vector<8x128xf32>
    %35 = arith.mulf %25, %34 : vector<8x128xf32>
    %36 = vector.broadcast %3 : vector<1x128xf32> to vector<8x128xf32>
    %37 = arith.mulf %35, %36 : vector<8x128xf32>
    %38 = vector.broadcast %4 : vector<1x128xf32> to vector<8x128xf32>
    %39 = arith.addf %37, %38 : vector<8x128xf32>
    %cst_11 = arith.constant 0.000000e+00 : f32
    %40 = vector.broadcast %cst_11 : f32 to vector<8x128xf32>
    %41 = arith.cmpf oge, %39, %40 : vector<8x128xf32>
    %cst_12 = arith.constant 0.00999999977 : f32
    %42 = vector.broadcast %cst_12 : f32 to vector<8x128xf32>
    %43 = arith.mulf %42, %39 : vector<8x128xf32>
    %44 = arith.select %41, %39, %43 : vector<8x128xi1>, vector<8x128xf32>
    %c0_13 = arith.constant 0 : index
    %c0_14 = arith.constant 0 : index
    %45 = vector.load %arg3[%c0_13, %c0_14] : memref<128x128xf32, #tpu.memory_space<vmem>>, vector<128x128xf32>
    %cst_15 = arith.constant dense<0.000000e+00> : vector<8x128xf32>
    %46 = tpu.matmul %44, %45, %cst_15 {dimension_numbers = #tpu.dot_dimension_numbers<[1], [0], [0], [1], [0, 0, 1, 1], [], []>} : vector<8x128xf32>, vector<128x128xf32>, vector<8x128xf32> -> vector<8x128xf32>
    %47 = vector.broadcast %5 : vector<1x128xf32> to vector<8x128xf32>
    %48 = arith.addf %46, %47 : vector<8x128xf32>
    %cst_16 = arith.constant dense<0.000000e+00> : vector<8xf32>
    %49 = vector.multi_reduction <add>, %48, %cst_16 [1] : vector<8x128xf32> to vector<8xf32>
    %50 = vector.shape_cast %49 : vector<8xf32> to vector<8x1xf32>
    %cst_17 = arith.constant 3.125000e-02 : f32
    %51 = vector.broadcast %cst_17 : f32 to vector<8x1xf32>
    %52 = arith.mulf %50, %51 : vector<8x1xf32>
    %53 = vector.broadcast %52 : vector<8x1xf32> to vector<8x128xf32>
    %54 = arith.subf %48, %53 : vector<8x128xf32>
    %55 = tpu.iota {dimensions = array<i32: 1>} : vector<1x128xi32>
    %c32_i32_18 = arith.constant 32 : i32
    %56 = vector.broadcast %c32_i32_18 : i32 to vector<1x128xi32>
    %57 = arith.cmpi slt, %55, %56 : vector<1x128xi32>
    %cst_19 = arith.constant 0.000000e+00 : f32
    %58 = vector.shape_cast %57 : vector<1x128xi1> to vector<1x128xi1>
    %59 = vector.broadcast %58 : vector<1x128xi1> to vector<8x128xi1>
    %60 = vector.broadcast %cst_19 : f32 to vector<8x128xf32>
    %61 = arith.select %59, %54, %60 : vector<8x128xi1>, vector<8x128xf32>
    %62 = arith.mulf %61, %61 : vector<8x128xf32>
    %cst_20 = arith.constant dense<0.000000e+00> : vector<8xf32>
    %63 = vector.multi_reduction <add>, %62, %cst_20 [1] : vector<8x128xf32> to vector<8xf32>
    %64 = vector.shape_cast %63 : vector<8xf32> to vector<8x1xf32>
    %cst_21 = arith.constant 3.125000e-02 : f32
    %65 = vector.broadcast %cst_21 : f32 to vector<8x1xf32>
    %66 = arith.mulf %64, %65 : vector<8x1xf32>
    %cst_22 = arith.constant 9.99999974E-6 : f32
    %67 = vector.broadcast %cst_22 : f32 to vector<8x1xf32>
    %68 = arith.addf %66, %67 : vector<8x1xf32>
    %69 = math.rsqrt %68 : vector<8x1xf32>
    %70 = vector.broadcast %69 : vector<8x1xf32> to vector<8x128xf32>
    %71 = arith.mulf %61, %70 : vector<8x128xf32>
    %72 = vector.broadcast %6 : vector<1x128xf32> to vector<8x128xf32>
    %73 = arith.mulf %71, %72 : vector<8x128xf32>
    %74 = vector.broadcast %7 : vector<1x128xf32> to vector<8x128xf32>
    %75 = arith.addf %73, %74 : vector<8x128xf32>
    %cst_23 = arith.constant 0.000000e+00 : f32
    %76 = vector.broadcast %cst_23 : f32 to vector<8x128xf32>
    %77 = arith.cmpf oge, %75, %76 : vector<8x128xf32>
    %cst_24 = arith.constant 0.00999999977 : f32
    %78 = vector.broadcast %cst_24 : f32 to vector<8x128xf32>
    %79 = arith.mulf %78, %75 : vector<8x128xf32>
    %80 = arith.select %77, %75, %79 : vector<8x128xi1>, vector<8x128xf32>
    %c0_25 = arith.constant 0 : index
    %c0_26 = arith.constant 0 : index
    %81 = vector.load %arg4[%c0_25, %c0_26] : memref<128x128xf32, #tpu.memory_space<vmem>>, vector<128x128xf32>
    %cst_27 = arith.constant dense<0.000000e+00> : vector<8x128xf32>
    %82 = tpu.matmul %80, %81, %cst_27 {dimension_numbers = #tpu.dot_dimension_numbers<[1], [0], [0], [1], [0, 0, 1, 1], [], []>} : vector<8x128xf32>, vector<128x128xf32>, vector<8x128xf32> -> vector<8x128xf32>
    %83 = vector.broadcast %8 : vector<1x128xf32> to vector<8x128xf32>
    %84 = arith.addf %82, %83 : vector<8x128xf32>
    %85 = vector.extract_strided_slice %84 {offsets = [0, 0], sizes = [8, 4], strides = [1, 1]} : vector<8x128xf32> to vector<8x4xf32>
    %86 = math.tanh %85 : vector<8x4xf32>
    %cst_28 = arith.constant 1.000000e+00 : f32
    %87 = vector.broadcast %cst_28 : f32 to vector<8x4xf32>
    %88 = arith.mulf %86, %87 : vector<8x4xf32>
    %c0_29 = arith.constant 0 : index
    %c0_30 = arith.constant 0 : index
    %89 = vector.load %arg6[%c0_29, %c0_30] : memref<8x4xf32, #tpu.memory_space<vmem>>, vector<8x4xf32>
    tpu.vector_store %arg6[%c0_29, %c0_30], %88 {strides = array<i32>} : memref<8x4xf32, #tpu.memory_space<vmem>>, vector<8x4xf32>,
    return
  }
  func.func @transform_0(%arg0: i32) -> (i32, i32) {
    %c0_i32 = arith.constant 0 : i32
    %c0_i32_0 = arith.constant 0 : i32
    return %arg0, %c0_i32 : i32, i32
  }
  func.func @transform_1(%arg0: i32) -> (i32, i32) {
    %c0_i32 = arith.constant 0 : i32
    %c0_i32_0 = arith.constant 0 : i32
    %c0_i32_1 = arith.constant 0 : i32
    return %c0_i32, %c0_i32_0 : i32, i32
  }
  func.func @transform_2(%arg0: i32) -> (i32, i32) {
    %c0_i32 = arith.constant 0 : i32
    %c0_i32_0 = arith.constant 0 : i32
    %c0_i32_1 = arith.constant 0 : i32
    return %c0_i32, %c0_i32_0 : i32, i32
  }
  func.func @transform_3(%arg0: i32) -> (i32, i32) {
    %c0_i32 = arith.constant 0 : i32
    %c0_i32_0 = arith.constant 0 : i32
    %c0_i32_1 = arith.constant 0 : i32
    return %c0_i32, %c0_i32_0 : i32, i32
  }
  func.func @transform_4(%arg0: i32) -> (i32, i32) {
    %c0_i32 = arith.constant 0 : i32
    %c0_i32_0 = arith.constant 0 : i32
    %c0_i32_1 = arith.constant 0 : i32
    return %c0_i32, %c0_i32_0 : i32, i32
  }
  func.func @transform_5(%arg0: i32) -> (i32, i32) {
    %c0_i32 = arith.constant 0 : i32
    %c0_i32_0 = arith.constant 0 : i32
    return %arg0, %c0_i32 : i32, i32
  }
}

</mosaic_0001>

<llo_original>
// kernel: _actor_forward_impl.1
$region0: #{_actor_forward_impl.1}
  #allocation0 [shape = 'u32[]', space=smem, size = 0x4, offset = 0x4, fixed_abs, tag = 'smem constant byte address 0x4 - core index']
  #allocation1 [shape = 'u32[144,128]{1,0:T(1,128)}', space=vmem, size = 0x12000, scoped, tag = 'internal scratch']
  %s0 = inlined_call_operand.vmem [shape: f32[8,16], index: 0, kind: input, shape index: {}]
  %s1 = inlined_call_operand.hbm [shape: f32[16,128], index: 1, kind: input, shape index: {}]
  %s2 = inlined_call_operand.hbm [shape: f32[128,128], index: 2, kind: input, shape index: {}]
  %s3 = inlined_call_operand.hbm [shape: f32[128,128], index: 3, kind: input, shape index: {}]
  %s4 = inlined_call_operand.vmem [shape: f32[8,128], index: 4, kind: input, shape index: {}]
  %s5 = inlined_call_operand.vmem [shape: f32[8,4], index: 5, kind: output, shape index: {}]
  %s6 = sld [smem:[#allocation0]]
  $region42: #{_actor_forward_impl.1} parent=0
    _
  %s8 = ssub.s32 1, %s6
  %s9 = scalar_select 0, %s8, %s6
  $region1: #{_actor_forward_impl.1} parent=0
    #allocation2 [shape = 'u8[8192]{0}', space=vmem, size = 0x2000, scoped, tag = 'input window, operand 1, single buffered']
    #allocation3 [shape = 's32[1]{0}', space=sflag, size = 0x4, scoped, tag = 'scoped memory for _actor_forward_impl.1']
    #allocation4 [shape = 'u8[65536]{0}', space=vmem, size = 0x10000, scoped, tag = 'input window, operand 2, single buffered']
    #allocation5 [shape = 's32[1]{0}', space=sflag, size = 0x4, scoped, tag = 'scoped memory for _actor_forward_impl.1']
    #allocation6 [shape = 'u8[65536]{0}', space=vmem, size = 0x10000, scoped, tag = 'input window, operand 3, single buffered']
    %10 = vsyncpa [#allocation3], 0
    %11 = vsyncpa [#allocation5], 0
    // Predicated region
    $region2: #{_actor_forward_impl.1} parent=1 // pred_check
      _
    $region3: #{_actor_forward_impl.1} parent=1 // pred_check_branch
      %13 = sbr.rel (0) target = $region5
    $region4: #{_actor_forward_impl.1} parent=1 // pred_region
      _
    $region5: #{_actor_forward_impl.1} parent=1 // pred_fallthru
      _
    // Predicated region
    $region6: #{_actor_forward_impl.1} parent=1 // pred_check
      _
    $region7: #{_actor_forward_impl.1} parent=1 // pred_check_branch
      %15 = sbr.rel (0) target = $region9
    $region8: #{_actor_forward_impl.1} parent=1 // pred_region
      %s17 = ssub.s32 256, 256
      %18 = vsyncadd [#allocation3], %s17
      %s19 = sshll.u32 [#allocation2], 4
      %s20 = int_to_ptr.vmem [resolvable:$true] %s19
      %25 = dma.hbm_to_vmem [thread:$0]  %s1, 256, %s20, [#allocation3], 128, 128, 8
    $region9: #{_actor_forward_impl.1} parent=1 // pred_fallthru
      _
    // Predicated region
    $region10: #{_actor_forward_impl.1} parent=1 // pred_check
      _
    $region11: #{_actor_forward_impl.1} parent=1 // pred_check_branch
      %27 = sbr.rel (0) target = $region13
    $region12: #{_actor_forward_impl.1} parent=1 // pred_region
      %s29 = ssub.s32 2048, 2048
      %30 = vsyncadd [#allocation5], %s29
      %s31 = sshll.u32 [#allocation4], 4
      %s32 = int_to_ptr.vmem [resolvable:$true] %s31
      %37 = dma.hbm_to_vmem [thread:$0]  %s2, 2048, %s32, [#allocation5], 128, 128, 8
    $region13: #{_actor_forward_impl.1} parent=1 // pred_fallthru
      _
    // Predicated region
    $region14: #{_actor_forward_impl.1} parent=1 // pred_check
      _
    $region15: #{_actor_forward_impl.1} parent=1 // pred_check_branch
      %39 = sbr.rel (0) target = $region17
    $region16: #{_actor_forward_impl.1} parent=1 // pred_region
      %s41 = ssub.s32 2048, 2048
      %42 = vsyncadd [#allocation5], %s41
      %s43 = sshll.u32 [#allocation6], 4
      %s44 = int_to_ptr.vmem [resolvable:$true] %s43
      %49 = dma.hbm_to_vmem [thread:$0]  %s3, 2048, %s44, [#allocation5], 128, 128, 8
    $region17: #{_actor_forward_impl.1} parent=1 // pred_fallthru
      _
    // Predicated region
    $region18: #{_actor_forward_impl.1} parent=1 // pred_check
      _
    $region19: #{_actor_forward_impl.1} parent=1 // pred_check_branch
      %51 = sbr.rel (0) target = $region21
    $region20: #{_actor_forward_impl.1} parent=1 // pred_region
      _
    $region21: #{_actor_forward_impl.1} parent=1 // pred_fallthru
      _
    // Predicated region
    $region22: #{_actor_forward_impl.1} parent=1 // pred_check
      _
    $region23: #{_actor_forward_impl.1} parent=1 // pred_check_branch
      %53 = sbr.rel (0) target = $region25
    $region24: #{_actor_forward_impl.1} parent=1 // pred_region
      %54 = dma.done [#allocation3], 256
    $region25: #{_actor_forward_impl.1} parent=1 // pred_fallthru
      _
    // Predicated region
    $region26: #{_actor_forward_impl.1} parent=1 // pred_check
      _
    $region27: #{_actor_forward_impl.1} parent=1 // pred_check_branch
      %56 = sbr.rel (0) target = $region29
    $region28: #{_actor_forward_impl.1} parent=1 // pred_region
      %57 = dma.done [#allocation5], 2048
    $region29: #{_actor_forward_impl.1} parent=1 // pred_fallthru
      _
    // Predicated region
    $region30: #{_actor_forward_impl.1} parent=1 // pred_check
      _
    $region31: #{_actor_forward_impl.1} parent=1 // pred_check_branch
      %59 = sbr.rel (0) target = $region33
    $region32: #{_actor_forward_impl.1} parent=1 // pred_region
      %60 = dma.done [#allocation5], 2048
    $region33: #{_actor_forward_impl.1} parent=1 // pred_fallthru
      _
    %v61 = vld [vmem:[%s0] sm:$0xff]
    %v62 = vld [vmem:[%s4] sm:$0xff]
    %v63 = vld [vmem:[#allocation2] sm:$0xff]
    %v64 = vld [vmem:[#allocation2 + $0x8] sm:$0xff]
    %v65 = vlaneseq
    %v66 = vshrl.u32 %v65, 7
    %v67 = vsub.s32 0, %v66
    %v68 = vrot.slane %v62, %v67
    %vm69 = vcmask 130048
    %v71 = vsel %vm69, %v61, 0
    %73 = vmatprep.subr.mxu0 0.0
    %74 = vmatpush1.msra.mxu0 0.0
    %75 = vmatprep.subr.mxu0 0.0
    %76 = vmatpush1.msra.mxu0 0.0
    %77 = vmatprep.subr.mxu0 0.0
    %78 = vmatpush1.msra.mxu0 0.0
    %79 = vmatprep.subr.mxu0 0.0
    %80 = vmatpush1.msra.mxu0 0.0
    %81 = vmatprep.subr.mxu0 0.0
    %82 = vmatpush1.msra.mxu0 0.0
    %83 = vmatprep.subr.mxu0 0.0
    %84 = vmatpush1.msra.mxu0 0.0
    %85 = vmatprep.subr.mxu0 0.0
    %86 = vmatpush1.msra.mxu0 0.0
    %87 = vmatprep.subr.mxu0 0.0
    %88 = vmatpush1.msra.mxu0 0.0
    %89 = vmatprep.subr.mxu0 0.0
    %90 = vmatpush1.msra.mxu0 0.0
    %91 = vmatprep.subr.mxu0 0.0
    %92 = vmatpush1.msra.mxu0 0.0
    %93 = vmatprep.subr.mxu0 0.0
    %94 = vmatpush1.msra.mxu0 0.0
    %95 = vmatprep.subr.mxu0 0.0
    %96 = vmatpush1.msra.mxu0 0.0
    %97 = vmatprep.subr.mxu0 0.0
    %98 = vmatpush1.msra.mxu0 0.0
    %99 = vmatprep.subr.mxu0 0.0
    %100 = vmatpush1.msra.mxu0 0.0
    %101 = vmatprep.subr.mxu0 0.0
    %102 = vmatpush1.msra.mxu0 %v64
    %103 = vmatprep.subr.mxu0 0.0
    %104 = vmatpush1.msra.mxu0 %v63
    %105 = vmatprep.subr.mxu0 0.0
    %106 = vmatpush2.msra.mxu0 0.0
    %107 = vmatprep.subr.mxu0 0.0
    %108 = vmatpush2.msra.mxu0 0.0
    %109 = vmatprep.subr.mxu0 0.0
    %110 = vmatpush2.msra.mxu0 0.0
    %111 = vmatprep.subr.mxu0 0.0
    %112 = vmatpush2.msra.mxu0 0.0
    %113 = vmatprep.subr.mxu0 0.0
    %114 = vmatpush2.msra.mxu0 0.0
    %115 = vmatprep.subr.mxu0 0.0
    %116 = vmatpush2.msra.mxu0 0.0
    %117 = vmatprep.subr.mxu0 0.0
    %118 = vmatpush2.msra.mxu0 0.0
    %119 = vmatprep.subr.mxu0 0.0
    %120 = vmatpush2.msra.mxu0 0.0
    %121 = vmatprep.subr.mxu0 0.0
    %122 = vmatpush2.msra.mxu0 0.0
    %123 = vmatprep.subr.mxu0 0.0
    %124 = vmatpush2.msra.mxu0 0.0
    %125 = vmatprep.subr.mxu0 0.0
    %126 = vmatpush2.msra.mxu0 0.0
    %127 = vmatprep.subr.mxu0 0.0
    %128 = vmatpush2.msra.mxu0 0.0
    %129 = vmatprep.subr.mxu0 0.0
    %130 = vmatpush2.msra.mxu0 0.0
    %131 = vmatprep.subr.mxu0 0.0
    %132 = vmatpush2.msra.mxu0 0.0
    %133 = vmatprep.subr.mxu0 0.0
    %134 = vmatpush2.msra.mxu0 0.0
    %135 = vmatprep.subr.mxu0 0.0
    %136 = vmatpush2.msra.mxu0 0.0
    %137 = vmatprep.mubr.f32.mxu0 0.0
    %138 = vmatmul.mubr.f32.gmra.mxu0 %v71
    %v139 = vpop.f32.mrf.mxu0
    %v140 = vadd.f32 %v68, %v139
    %v141 = vpop.f32.mrf.mxu0
    %142 = vdwg.mxu0
    %143 = vadd.xlane.f32.xlu0 %v140
    %v144 = vpop.xlane.xlu0 %143
    %v145 = vmul.f32 %v144, 0.03125
    %v146 = vsub.f32 %v140, %v145
    %v147 = vlaneseq
    %v148 = vand.u32 %v147, 127
    %vm149 = vcmp.lt.s32.totalorder %v148, 32
    %v150 = vsel %vm149, 1, 0
    %vm151 = vcmp.eq.s32.totalorder %v150, 1
    %v152 = vsel %vm151, %v146, 0.0
    %v153 = vmul.f32 %v152, %v152
    %154 = vadd.xlane.f32.xlu0 %v153
    %v155 = vpop.xlane.xlu0 %154
    %v156 = vmul.f32 %v155, 0.03125
    %v157 = vadd.f32 %v156, 1e-05
    %v158 = vrsqrt.pop %v157
    %v159 = vmul.f32 %v152, %v158
    %v160 = vlaneseq
    %v161 = vshrl.u32 %v160, 7
    %v162 = vsub.s32 1, %v161
    %v163 = vrot.slane %v62, %v162
    %v164 = vmul.f32 %v159, %v163
    %v165 = vlaneseq
    %v166 = vshrl.u32 %v165, 7
    %v167 = vsub.s32 2, %v166
    %v168 = vrot.slane %v62, %v167
    %v169 = vadd.f32 %v164, %v168
    %vm170 = vcmp.ge.f32.partialorder %v169, 0.0
    %v171 = vmul.f32 %v169, 0.01
    %v172 = vsel %vm170, %v169, %v171
    %v173 = vld [vmem:[#allocation4] sm:$0xff]
    %v174 = vld [vmem:[#allocation4 + $0x8] sm:$0xff]
    %v175 = vld [vmem:[#allocation4 + $0x10] sm:$0xff]
    %v176 = vld [vmem:[#allocation4 + $0x18] sm:$0xff]
    %v177 = vld [vmem:[#allocation4 + $0x20] sm:$0xff]
    %v178 = vld [vmem:[#allocation4 + $0x28] sm:$0xff]
    %v179 = vld [vmem:[#allocation4 + $0x30] sm:$0xff]
    %v180 = vld [vmem:[#allocation4 + $0x38] sm:$0xff]
    %v181 = vld [vmem:[#allocation4 + $0x40] sm:$0xff]
    %v182 = vld [vmem:[#allocation4 + $0x48] sm:$0xff]
    %v183 = vld [vmem:[#allocation4 + $0x50] sm:$0xff]
    %v184 = vld [vmem:[#allocation4 + $0x58] sm:$0xff]
    %v185 = vld [vmem:[#allocation4 + $0x60] sm:$0xff]
    %v186 = vld [vmem:[#allocation4 + $0x68] sm:$0xff]
    %v187 = vld [vmem:[#allocation4 + $0x70] sm:$0xff]
    %v188 = vld [vmem:[#allocation4 + $0x78] sm:$0xff]
    %v189 = vlaneseq
    %v190 = vshrl.u32 %v189, 7
    %v191 = vsub.s32 3, %v190
    %v192 = vrot.slane %v62, %v191
    %193 = vmatprep.subr.mxu0 0.0
    %194 = vmatpush1.msra.mxu0 %v188
    %195 = vmatprep.subr.mxu0 0.0
    %196 = vmatpush1.msra.mxu0 %v187
    %197 = vmatprep.subr.mxu0 0.0
    %198 = vmatpush1.msra.mxu0 %v186
    %199 = vmatprep.subr.mxu0 0.0
    %200 = vmatpush1.msra.mxu0 %v185
    %201 = vmatprep.subr.mxu0 0.0
    %202 = vmatpush1.msra.mxu0 %v184
    %203 = vmatprep.subr.mxu0 0.0
    %204 = vmatpush1.msra.mxu0 %v183
    %205 = vmatprep.subr.mxu0 0.0
    %206 = vmatpush1.msra.mxu0 %v182
    %207 = vmatprep.subr.mxu0 0.0
    %208 = vmatpush1.msra.mxu0 %v181
    %209 = vmatprep.subr.mxu0 0.0
    %210 = vmatpush1.msra.mxu0 %v180
    %211 = vmatprep.subr.mxu0 0.0
    %212 = vmatpush1.msra.mxu0 %v179
    %213 = vmatprep.subr.mxu0 0.0
    %214 = vmatpush1.msra.mxu0 %v178
    %215 = vmatprep.subr.mxu0 0.0
    %216 = vmatpush1.msra.mxu0 %v177
    %217 = vmatprep.subr.mxu0 0.0
    %218 = vmatpush1.msra.mxu0 %v176
    %219 = vmatprep.subr.mxu0 0.0
    %220 = vmatpush1.msra.mxu0 %v175
    %221 = vmatprep.subr.mxu0 0.0
    %222 = vmatpush1.msra.mxu0 %v174
    %223 = vmatprep.subr.mxu0 0.0
    %224 = vmatpush1.msra.mxu0 %v173
    %225 = vmatprep.subr.mxu0 0.0
    %226 = vmatpush2.msra.mxu0 0.0
    %227 = vmatprep.subr.mxu0 0.0
    %228 = vmatpush2.msra.mxu0 0.0
    %229 = vmatprep.subr.mxu0 0.0
    %230 = vmatpush2.msra.mxu0 0.0
    %231 = vmatprep.subr.mxu0 0.0
    %232 = vmatpush2.msra.mxu0 0.0
    %233 = vmatprep.subr.mxu0 0.0
    %234 = vmatpush2.msra.mxu0 0.0
    %235 = vmatprep.subr.mxu0 0.0
    %236 = vmatpush2.msra.mxu0 0.0
    %237 = vmatprep.subr.mxu0 0.0
    %238 = vmatpush2.msra.mxu0 0.0
    %239 = vmatprep.subr.mxu0 0.0
    %240 = vmatpush2.msra.mxu0 0.0
    %241 = vmatprep.subr.mxu0 0.0
    %242 = vmatpush2.msra.mxu0 0.0
    %243 = vmatprep.subr.mxu0 0.0
    %244 = vmatpush2.msra.mxu0 0.0
    %245 = vmatprep.subr.mxu0 0.0
    %246 = vmatpush2.msra.mxu0 0.0
    %247 = vmatprep.subr.mxu0 0.0
    %248 = vmatpush2.msra.mxu0 0.0
    %249 = vmatprep.subr.mxu0 0.0
    %250 = vmatpush2.msra.mxu0 0.0
    %251 = vmatprep.subr.mxu0 0.0
    %252 = vmatpush2.msra.mxu0 0.0
    %253 = vmatprep.subr.mxu0 0.0
    %254 = vmatpush2.msra.mxu0 0.0
    %255 = vmatprep.subr.mxu0 0.0
    %256 = vmatpush2.msra.mxu0 0.0
    %257 = vmatprep.mubr.f32.mxu0 0.0
    %258 = vmatmul.mubr.f32.gmra.mxu0 %v172
    %v259 = vpop.f32.mrf.mxu0
    %v260 = vadd.f32 %v192, %v259
    %v261 = vpop.f32.mrf.mxu0
    %262 = vdwg.mxu0
    %263 = vadd.xlane.f32.xlu0 %v260
    %v264 = vpop.xlane.xlu0 %263
    %v265 = vmul.f32 %v264, 0.03125
    %v266 = vsub.f32 %v260, %v265
    %v267 = vsel %vm151, %v266, 0.0
    %v268 = vmul.f32 %v267, %v267
    %269 = vadd.xlane.f32.xlu0 %v268
    %v270 = vpop.xlane.xlu0 %269
    %v271 = vmul.f32 %v270, 0.03125
    %v272 = vadd.f32 %v271, 1e-05
    %v273 = vrsqrt.pop %v272
    %v274 = vmul.f32 %v267, %v273
    %v275 = vlaneseq
    %v276 = vshrl.u32 %v275, 7
    %v277 = vsub.s32 4, %v276
    %v278 = vrot.slane %v62, %v277
    %v279 = vmul.f32 %v274, %v278
    %v280 = vlaneseq
    %v281 = vshrl.u32 %v280, 7
    %v282 = vsub.s32 5, %v281
    %v283 = vrot.slane %v62, %v282
    %v284 = vadd.f32 %v279, %v283
    %vm285 = vcmp.ge.f32.partialorder %v284, 0.0
    %v286 = vmul.f32 %v284, 0.01
    %v287 = vsel %vm285, %v284, %v286
    %v288 = vld [vmem:[#allocation6] sm:$0xff]
    %v289 = vld [vmem:[#allocation6 + $0x8] sm:$0xff]
    %v290 = vld [vmem:[#allocation6 + $0x10] sm:$0xff]
    %v291 = vld [vmem:[#allocation6 + $0x18] sm:$0xff]
    %v292 = vld [vmem:[#allocation6 + $0x20] sm:$0xff]
    %v293 = vld [vmem:[#allocation6 + $0x28] sm:$0xff]
    %v294 = vld [vmem:[#allocation6 + $0x30] sm:$0xff]
    %v295 = vld [vmem:[#allocation6 + $0x38] sm:$0xff]
    %v296 = vld [vmem:[#allocation6 + $0x40] sm:$0xff]
    %v297 = vld [vmem:[#allocation6 + $0x48] sm:$0xff]
    %v298 = vld [vmem:[#allocation6 + $0x50] sm:$0xff]
    %v299 = vld [vmem:[#allocation6 + $0x58] sm:$0xff]
    %v300 = vld [vmem:[#allocation6 + $0x60] sm:$0xff]
    %v301 = vld [vmem:[#allocation6 + $0x68] sm:$0xff]
    %v302 = vld [vmem:[#allocation6 + $0x70] sm:$0xff]
    %v303 = vld [vmem:[#allocation6 + $0x78] sm:$0xff]
    %v304 = vlaneseq
    %v305 = vshrl.u32 %v304, 7
    %v306 = vsub.s32 6, %v305
    %v307 = vrot.slane %v62, %v306
    %308 = vmatprep.subr.mxu0 0.0
    %309 = vmatpush1.msra.mxu0 %v303
    %310 = vmatprep.subr.mxu0 0.0
    %311 = vmatpush1.msra.mxu0 %v302
    %312 = vmatprep.subr.mxu0 0.0
    %313 = vmatpush1.msra.mxu0 %v301
    %314 = vmatprep.subr.mxu0 0.0
    %315 = vmatpush1.msra.mxu0 %v300
    %316 = vmatprep.subr.mxu0 0.0
    %317 = vmatpush1.msra.mxu0 %v299
    %318 = vmatprep.subr.mxu0 0.0
    %319 = vmatpush1.msra.mxu0 %v298
    %320 = vmatprep.subr.mxu0 0.0
    %321 = vmatpush1.msra.mxu0 %v297
    %322 = vmatprep.subr.mxu0 0.0
    %323 = vmatpush1.msra.mxu0 %v296
    %324 = vmatprep.subr.mxu0 0.0
    %325 = vmatpush1.msra.mxu0 %v295
    %326 = vmatprep.subr.mxu0 0.0
    %327 = vmatpush1.msra.mxu0 %v294
    %328 = vmatprep.subr.mxu0 0.0
    %329 = vmatpush1.msra.mxu0 %v293
    %330 = vmatprep.subr.mxu0 0.0
    %331 = vmatpush1.msra.mxu0 %v292
    %332 = vmatprep.subr.mxu0 0.0
    %333 = vmatpush1.msra.mxu0 %v291
    %334 = vmatprep.subr.mxu0 0.0
    %335 = vmatpush1.msra.mxu0 %v290
    %336 = vmatprep.subr.mxu0 0.0
    %337 = vmatpush1.msra.mxu0 %v289
    %338 = vmatprep.subr.mxu0 0.0
    %339 = vmatpush1.msra.mxu0 %v288
    %340 = vmatprep.subr.mxu0 0.0
    %341 = vmatpush2.msra.mxu0 0.0
    %342 = vmatprep.subr.mxu0 0.0
    %343 = vmatpush2.msra.mxu0 0.0
    %344 = vmatprep.subr.mxu0 0.0
    %345 = vmatpush2.msra.mxu0 0.0
    %346 = vmatprep.subr.mxu0 0.0
    %347 = vmatpush2.msra.mxu0 0.0
    %348 = vmatprep.subr.mxu0 0.0
    %349 = vmatpush2.msra.mxu0 0.0
    %350 = vmatprep.subr.mxu0 0.0
    %351 = vmatpush2.msra.mxu0 0.0
    %352 = vmatprep.subr.mxu0 0.0
    %353 = vmatpush2.msra.mxu0 0.0
    %354 = vmatprep.subr.mxu0 0.0
    %355 = vmatpush2.msra.mxu0 0.0
    %356 = vmatprep.subr.mxu0 0.0
    %357 = vmatpush2.msra.mxu0 0.0
    %358 = vmatprep.subr.mxu0 0.0
    %359 = vmatpush2.msra.mxu0 0.0
    %360 = vmatprep.subr.mxu0 0.0
    %361 = vmatpush2.msra.mxu0 0.0
    %362 = vmatprep.subr.mxu0 0.0
    %363 = vmatpush2.msra.mxu0 0.0
    %364 = vmatprep.subr.mxu0 0.0
    %365 = vmatpush2.msra.mxu0 0.0
    %366 = vmatprep.subr.mxu0 0.0
    %367 = vmatpush2.msra.mxu0 0.0
    %368 = vmatprep.subr.mxu0 0.0
    %369 = vmatpush2.msra.mxu0 0.0
    %370 = vmatprep.subr.mxu0 0.0
    %371 = vmatpush2.msra.mxu0 0.0
    %372 = vmatprep.mubr.f32.mxu0 0.0
    %373 = vmatmul.mubr.f32.gmra.mxu0 %v287
    %v374 = vpop.f32.mrf.mxu0
    %v375 = vadd.f32 %v307, %v374
    %v376 = vpop.f32.mrf.mxu0
    %377 = vdwg.mxu0
    %v378 = vtanh.pop %v375
    %vm379 = vcmask 31744
    %380 = vst.msk [vmem:[%s5] sm:$0xff] %vm379, %v378
    // Predicated region
    $region34: #{_actor_forward_impl.1} parent=1 // pred_check
      _
    $region35: #{_actor_forward_impl.1} parent=1 // pred_check_branch
      %382 = sbr.rel (0) target = $region37
    $region36: #{_actor_forward_impl.1} parent=1 // pred_region
      _
    $region37: #{_actor_forward_impl.1} parent=1 // pred_fallthru
      _
    // Predicated region
    $region38: #{_actor_forward_impl.1} parent=1 // pred_check
      _
    $region39: #{_actor_forward_impl.1} parent=1 // pred_check_branch
      %384 = sbr.rel (0) target = $region41
    $region40: #{_actor_forward_impl.1} parent=1 // pred_region
      _
    $region41: #{_actor_forward_impl.1} parent=1 // pred_fallthru
      _
    %385 = vsyncpa [#allocation3], 1
    %386 = vsyncpa [#allocation5], 1

</llo_original>
